<compile_context>
chip_gen: v6e
topology: v6e:2x2x1
jax: 0.10.0
libtpu: 0.0.40
codegen_flags: <defaults>
</compile_context>

<pallas_src>
import jax
import jax.numpy as jnp
from jax.experimental import pallas as pl
from jax.experimental.pallas import tpu as pltpu


def cde_mlp_kernel(x_ref, w1_ref, b1_ref, w2_ref, b2_ref, w3_ref, b3_ref, o_ref):
    cdt = w1_ref.dtype
    # Layer 1: Linear(H -> H) + ReLU.  (appended time feature pre-folded into b1_eff)
    h = jnp.dot(x_ref[...], w1_ref[...], preferred_element_type=jnp.float32)
    h = jnp.maximum(h + b1_ref[...], 0.0)
    # Layer 2: Linear(H -> H) + ReLU   (num_layer = 1)
    h = jnp.dot(h.astype(cdt), w2_ref[...], preferred_element_type=jnp.float32)
    h = jnp.maximum(h + b2_ref[...], 0.0)
    # Layer 3: Linear(H -> H*I) + Tanh  (output lane dim H*I = 128 -> lane-dense store)
    h = jnp.dot(h.astype(cdt), w3_ref[...], preferred_element_type=jnp.float32)
    o_ref[...] = jnp.tanh(h + b3_ref[...])
    # TODO(synk): nn.Dropout layers are identity here (dropout_rate=0.0 / eval mode).


def _round_up(n, m):
    return ((n + m - 1) // m) * m


def _vmem_limit_bytes(tb, H, HI, cbytes):
    # double-buffered in/out tiles + double-buffered (grid-invariant) weights/biases
    weights = (2 * H * H + H * HI) * cbytes + (2 * H + HI) * 4
    tiles = tb * H * cbytes + tb * HI * 4
    interm = tb * (H + HI) * 4
    est = 2 * (weights + tiles) + interm
    return int(min(64 << 20, max(32 << 20, 2 * est)))


def make_cde_mlp(Bp, H, HI, tb, compute_dtype):
    """Build the pallas_call for padded batch Bp (multiple of tb), hidden H, out width HI."""
    grid = (Bp // tb,)
    return pl.pallas_call(
        cde_mlp_kernel,
        out_shape=jax.ShapeDtypeStruct((Bp, HI), jnp.float32),
        grid_spec=pltpu.PrefetchScalarGridSpec(
            num_scalar_prefetch=0,
            grid=grid,
            in_specs=[
                pl.BlockSpec((tb, H),  lambda i: (i, 0)),   # x tile            (compute dtype)
                pl.BlockSpec((H, H),   lambda i: (0, 0)),   # W1[:, :H]^T       (compute dtype)
                pl.BlockSpec((1, H),   lambda i: (0, 0)),   # b1 + t*W1[:, H]   (f32)
                pl.BlockSpec((H, H),   lambda i: (0, 0)),   # W2^T
                pl.BlockSpec((1, H),   lambda i: (0, 0)),   # b2
                pl.BlockSpec((H, HI),  lambda i: (0, 0)),   # W3^T
                pl.BlockSpec((1, HI),  lambda i: (0, 0)),   # b3
            ],
            out_specs=pl.BlockSpec((tb, HI), lambda i: (i, 0)),
        ),
        compiler_params=pltpu.CompilerParams(
            dimension_semantics=("parallel",),
            vmem_limit_bytes=_vmem_limit_bytes(
                tb, H, HI, jnp.dtype(compute_dtype).itemsize),
        ),
        # TODO(synk): for large H*I, single-buffer the grid-invariant weight specs
        # (pipeline_mode=pl.Buffered(1)) or tile W3's output dim so it fits v7x's 64 MiB VMEM.
    )


def make_cde_integrand(params, input_size, hidden_size, tb=128,
                       compute_dtype=jnp.bfloat16, inhomogeneous=True):
    """One-time weight prep + jitted forward(t, x) -> (B, H, I) mirroring CDEIntegrand."""
    w1, b1, w2, b2, w3, b3 = params
    H, I = hidden_size, input_size
    HI = H * I

    # Hoisted, one-time glue (outside the ODE-solver hot loop): transpose to
    # (in, out), split off the time column, cast matmul operands to bf16.
    if inhomogeneous:
        w1_x = jnp.asarray(w1[:, :H].T, compute_dtype)              # (H, H)
        w1_t = jnp.asarray(w1[:, H], jnp.float32)                   # (H,) time column
    else:
        w1_x = jnp.asarray(w1.T, compute_dtype)
        w1_t = jnp.zeros((H,), jnp.float32)
    w2_T = jnp.asarray(w2.T, compute_dtype)                         # (H, H)
    w3_T = jnp.asarray(w3.T, compute_dtype)                         # (H, HI)
    b1_f = jnp.asarray(b1, jnp.float32)                             # (H,)
    b2_r = jnp.asarray(b2, jnp.float32).reshape(1, H)
    b3_r = jnp.asarray(b3, jnp.float32).reshape(1, HI)

    @jax.jit
    def forward(t, x):
        B = x.shape[0]
        # Batch tile: multiple of 8 sublanes, no larger than the (padded) batch.
        tb_eff = min(tb, _round_up(B, 8))
        Bp = _round_up(B, tb_eff)                                   # handle batch tail
        # Fold the appended time feature into the layer-1 bias (O(H) scalar work).
        b1_eff = (b1_f + jnp.asarray(t, jnp.float32) * w1_t).reshape(1, H)
        x_c = x.astype(compute_dtype)
        if Bp != B:
            x_c = jnp.pad(x_c, ((0, Bp - B), (0, 0)))
        kernel_fn = make_cde_mlp(Bp, H, HI, tb_eff, compute_dtype)
        y = kernel_fn(x_c, w1_x, b1_eff, w2_T, b2_r, w3_T, b3_r)    # (Bp, HI) f32
        return y[:B].reshape(B, H, I)                               # matches torch .view

    return forward


def init_params(key, input_size, hidden_size, inhomogeneous=True):
    """Deterministic synthetic params with PyTorch nn.Linear shapes (out, in)."""
    H, I = hidden_size, input_size
    Hin = H + int(inhomogeneous)
    ks = jax.random.split(key, 6)
    scale = 0.1
    w1 = scale * jax.random.normal(ks[0], (H, Hin), jnp.float32)
    b1 = scale * jax.random.normal(ks[1], (H,), jnp.float32)
    w2 = scale * jax.random.normal(ks[2], (H, H), jnp.float32)
    b2 = scale * jax.random.normal(ks[3], (H,), jnp.float32)
    w3 = scale * jax.random.normal(ks[4], (H * I, H), jnp.float32)
    b3 = scale * jax.random.normal(ks[5], (H * I,), jnp.float32)
    return (w1, b1, w2, b2, w3, b3)


def reference_forward(t, x, params, input_size, hidden_size):
    """Pure-JAX f32 reference of the PyTorch module (for correctness check)."""
    w1, b1, w2, b2, w3, b3 = params
    B = x.shape[0]
    t_col = jnp.broadcast_to(jnp.asarray(t, jnp.float32).reshape(1, 1), (B, 1))
    h = jnp.concatenate([x, t_col], axis=-1)
    h = jnp.maximum(h @ w1.T + b1, 0.0)
    h = jnp.maximum(h @ w2.T + b2, 0.0)
    y = jnp.tanh(h @ w3.T + b3)
    return y.reshape(-1, hidden_size, input_size)


if __name__ == "__main__":
    input_size = 4
    hidden_size = 32
    batch = 16                     # with tb=8 the grid is (2,): both v7x TCs get work

    key = jax.random.PRNGKey(0)
    kp, kx, kt = jax.random.split(key, 3)
    params = init_params(kp, input_size, hidden_size)
    x = jax.random.normal(kx, (batch, hidden_size), jnp.float32)
    t = jax.random.uniform(kt, (), jnp.float32)

    forward = make_cde_integrand(params, input_size, hidden_size, tb=8)

    out = jax.block_until_ready(forward(t, x))
    ref = reference_forward(t, x, params, input_size, hidden_size)
    assert out.shape == (batch, hidden_size, input_size)
    assert jnp.allclose(out, ref, atol=3e-2, rtol=3e-2), "mismatch vs reference (bf16 matmul)"

    # Exercise the batch-tail (padding) path with a non-multiple-of-tb batch.
    x_tail = x[:13]
    out_tail = jax.block_until_ready(forward(t, x_tail))
    ref_tail = reference_forward(t, x_tail, params, input_size, hidden_size)
    assert out_tail.shape == (13, hidden_size, input_size)
    assert jnp.allclose(out_tail, ref_tail, atol=3e-2, rtol=3e-2), "tail mismatch vs reference"

    print("KERNEL_OK")
</pallas_src>

<mosaic_0001>
module attributes {stable_mosaic.version = 11 : i64} {
  func.func @cde_mlp_kernel(%arg0: i32, %arg1: memref<8x32xbf16, #tpu.memory_space<vmem>>, %arg2: memref<32x32xbf16, #tpu.memory_space<vmem>>, %arg3: memref<1x32xf32, #tpu.memory_space<vmem>>, %arg4: memref<32x32xbf16, #tpu.memory_space<vmem>>, %arg5: memref<1x32xf32, #tpu.memory_space<vmem>>, %arg6: memref<32x128xbf16, #tpu.memory_space<vmem>>, %arg7: memref<1x128xf32, #tpu.memory_space<vmem>>, %arg8: memref<8x128xf32, #tpu.memory_space<vmem>>) attributes {dimension_semantics = [#tpu.dimension_semantics<parallel>], iteration_bounds = array<i64: 2>, scalar_prefetch = 0 : i64, scratch_operands = 0 : i64, tpu.core_type = #tpu.core_type<tc>, window_params = [{transform_indices = @transform_0, window_bounds = array<i64: 8, 32>}, {pipeline_mode = #tpu.pipeline_mode<synchronous>, transform_indices = @transform_1, window_bounds = array<i64: 32, 32>}, {pipeline_mode = #tpu.pipeline_mode<synchronous>, transform_indices = @transform_2, window_bounds = array<i64: 1, 32>}, {pipeline_mode = #tpu.pipeline_mode<synchronous>, transform_indices = @transform_3, window_bounds = array<i64: 32, 32>}, {pipeline_mode = #tpu.pipeline_mode<synchronous>, transform_indices = @transform_4, window_bounds = array<i64: 1, 32>}, {pipeline_mode = #tpu.pipeline_mode<synchronous>, transform_indices = @transform_5, window_bounds = array<i64: 32, 128>}, {pipeline_mode = #tpu.pipeline_mode<synchronous>, transform_indices = @transform_6, window_bounds = array<i64: 1, 128>}, {transform_indices = @transform_7, window_bounds = array<i64: 8, 128>}]} {
    %c0 = arith.constant 0 : index
    %c0_0 = arith.constant 0 : index
    %0 = vector.load %arg1[%c0, %c0_0] : memref<8x32xbf16, #tpu.memory_space<vmem>>, vector<8x32xbf16>
    %c0_1 = arith.constant 0 : index
    %c0_2 = arith.constant 0 : index
    %1 = vector.load %arg2[%c0_1, %c0_2] : memref<32x32xbf16, #tpu.memory_space<vmem>>, vector<32x32xbf16>
    %cst = arith.constant dense<0.000000e+00> : vector<8x32xf32>
    %2 = tpu.matmul %0, %1, %cst {dimension_numbers = #tpu.dot_dimension_numbers<[1], [0], [0], [1], [0, 0, 1, 1], [], []>} : vector<8x32xbf16>, vector<32x32xbf16>, vector<8x32xf32> -> vector<8x32xf32>
    %c0_3 = arith.constant 0 : index
    %c0_4 = arith.constant 0 : index
    %3 = vector.load %arg3[%c0_3, %c0_4] : memref<1x32xf32, #tpu.memory_space<vmem>>, vector<1x32xf32>
    %4 = vector.broadcast %3 : vector<1x32xf32> to vector<8x32xf32>
    %5 = arith.addf %2, %4 : vector<8x32xf32>
    %cst_5 = arith.constant 0.000000e+00 : f32
    %6 = vector.broadcast %cst_5 : f32 to vector<8x32xf32>
    %7 = arith.maximumf %5, %6 : vector<8x32xf32>
    %8 = arith.truncf %7 : vector<8x32xf32> to vector<8x32xbf16>
    %c0_6 = arith.constant 0 : index
    %c0_7 = arith.constant 0 : index
    %9 = vector.load %arg4[%c0_6, %c0_7] : memref<32x32xbf16, #tpu.memory_space<vmem>>, vector<32x32xbf16>
    %cst_8 = arith.constant dense<0.000000e+00> : vector<8x32xf32>
    %10 = tpu.matmul %8, %9, %cst_8 {dimension_numbers = #tpu.dot_dimension_numbers<[1], [0], [0], [1], [0, 0, 1, 1], [], []>} : vector<8x32xbf16>, vector<32x32xbf16>, vector<8x32xf32> -> vector<8x32xf32>
    %c0_9 = arith.constant 0 : index
    %c0_10 = arith.constant 0 : index
    %11 = vector.load %arg5[%c0_9, %c0_10] : memref<1x32xf32, #tpu.memory_space<vmem>>, vector<1x32xf32>
    %12 = vector.broadcast %11 : vector<1x32xf32> to vector<8x32xf32>
    %13 = arith.addf %10, %12 : vector<8x32xf32>
    %cst_11 = arith.constant 0.000000e+00 : f32
    %14 = vector.broadcast %cst_11 : f32 to vector<8x32xf32>
    %15 = arith.maximumf %13, %14 : vector<8x32xf32>
    %16 = arith.truncf %15 : vector<8x32xf32> to vector<8x32xbf16>
    %c0_12 = arith.constant 0 : index
    %c0_13 = arith.constant 0 : index
    %17 = vector.load %arg6[%c0_12, %c0_13] : memref<32x128xbf16, #tpu.memory_space<vmem>>, vector<32x128xbf16>
    %cst_14 = arith.constant dense<0.000000e+00> : vector<8x128xf32>
    %18 = tpu.matmul %16, %17, %cst_14 {dimension_numbers = #tpu.dot_dimension_numbers<[1], [0], [0], [1], [0, 0, 1, 1], [], []>} : vector<8x32xbf16>, vector<32x128xbf16>, vector<8x128xf32> -> vector<8x128xf32>
    %c0_15 = arith.constant 0 : index
    %c0_16 = arith.constant 0 : index
    %19 = vector.load %arg7[%c0_15, %c0_16] : memref<1x128xf32, #tpu.memory_space<vmem>>, vector<1x128xf32>
    %20 = vector.broadcast %19 : vector<1x128xf32> to vector<8x128xf32>
    %21 = arith.addf %18, %20 : vector<8x128xf32>
    %22 = math.tanh %21 : vector<8x128xf32>
    %c0_17 = arith.constant 0 : index
    %c0_18 = arith.constant 0 : index
    %23 = vector.load %arg8[%c0_17, %c0_18] : memref<8x128xf32, #tpu.memory_space<vmem>>, vector<8x128xf32>
    tpu.vector_store %arg8[%c0_17, %c0_18], %22 {strides = array<i32>} : memref<8x128xf32, #tpu.memory_space<vmem>>, vector<8x128xf32>,
    return
  }
  func.func @transform_0(%arg0: i32) -> (i32, i32) {
    %c0_i32 = arith.constant 0 : i32
    %c0_i32_0 = arith.constant 0 : i32
    return %arg0, %c0_i32 : i32, i32
  }
  func.func @transform_1(%arg0: i32) -> (i32, i32) {
    %c0_i32 = arith.constant 0 : i32
    %c0_i32_0 = arith.constant 0 : i32
    %c0_i32_1 = arith.constant 0 : i32
    return %c0_i32, %c0_i32_0 : i32, i32
  }
  func.func @transform_2(%arg0: i32) -> (i32, i32) {
    %c0_i32 = arith.constant 0 : i32
    %c0_i32_0 = arith.constant 0 : i32
    %c0_i32_1 = arith.constant 0 : i32
    return %c0_i32, %c0_i32_0 : i32, i32
  }
  func.func @transform_3(%arg0: i32) -> (i32, i32) {
    %c0_i32 = arith.constant 0 : i32
    %c0_i32_0 = arith.constant 0 : i32
    %c0_i32_1 = arith.constant 0 : i32
    return %c0_i32, %c0_i32_0 : i32, i32
  }
  func.func @transform_4(%arg0: i32) -> (i32, i32) {
    %c0_i32 = arith.constant 0 : i32
    %c0_i32_0 = arith.constant 0 : i32
    %c0_i32_1 = arith.constant 0 : i32
    return %c0_i32, %c0_i32_0 : i32, i32
  }
  func.func @transform_5(%arg0: i32) -> (i32, i32) {
    %c0_i32 = arith.constant 0 : i32
    %c0_i32_0 = arith.constant 0 : i32
    %c0_i32_1 = arith.constant 0 : i32
    return %c0_i32, %c0_i32_0 : i32, i32
  }
  func.func @transform_6(%arg0: i32) -> (i32, i32) {
    %c0_i32 = arith.constant 0 : i32
    %c0_i32_0 = arith.constant 0 : i32
    %c0_i32_1 = arith.constant 0 : i32
    return %c0_i32, %c0_i32_0 : i32, i32
  }
  func.func @transform_7(%arg0: i32) -> (i32, i32) {
    %c0_i32 = arith.constant 0 : i32
    %c0_i32_0 = arith.constant 0 : i32
    return %arg0, %c0_i32 : i32, i32
  }
}

</mosaic_0001>

<llo_original>
// kernel: forward.1
$region0: #{forward.1}
  #allocation0 [shape = 'u32[]', space=smem, size = 0x4, offset = 0x4, fixed_abs, tag = 'smem constant byte address 0x4 - core index']
  #allocation1 [shape = 'u32[144,128]{1,0:T(1,128)}', space=vmem, size = 0x12000, scoped, tag = 'internal scratch']
  %s0 = inlined_call_operand.vmem [shape: bf16[16,32], index: 0, kind: input, shape index: {}]
  %s1 = inlined_call_operand.hbm [shape: bf16[32,32], index: 1, kind: input, shape index: {}]
  %s2 = inlined_call_operand.vmem [shape: f32[1,32], index: 2, kind: input, shape index: {}]
  %s3 = inlined_call_operand.vmem [shape: bf16[32,32], index: 3, kind: input, shape index: {}]
  %s4 = inlined_call_operand.vmem [shape: f32[1,32], index: 4, kind: input, shape index: {}]
  %s5 = inlined_call_operand.vmem [shape: bf16[32,128], index: 5, kind: input, shape index: {}]
  %s6 = inlined_call_operand.vmem [shape: f32[1,128], index: 6, kind: input, shape index: {}]
  %s7 = inlined_call_operand.vmem [shape: f32[16,128], index: 7, kind: output, shape index: {}]
  %s8 = sld [smem:[#allocation0]]
  $region65: #{forward.1} parent=0
    _
  %s10 = ssub.s32 1, %s8
  %s11 = scalar_select 0, %s10, %s8
  $region1: #{forward.1} parent=0
    #allocation2 [shape = 'u8[8192]{0}', space=vmem, size = 0x2000, scoped, tag = 'input window, operand 1, single buffered']
    #allocation3 [shape = 's32[2]{0}', space=sflag, size = 0x8, scoped, tag = 'scoped memory for forward.1']
    %12 = vsyncpa [#allocation3], 0
    loop: start=0, step=1, limit=4
    $region2: #{forward.1} parent=1 // loop_pre_header
      _
    $region3: #{forward.1} parent=1 // loop_header
      %s14 = sphi 0, %s18
      %p15 = scmp.ge.s32.totalorder %s14, 4
      %s24 = sphi 0, %s26
      %s27 = sphi 0, %s24
      %s28 = sphi 0, %s27
      %s44 = sphi 0, %s28
      %s48 = sphi 0, %s48
      %s50 = sphi 0, %s48
      %s51 = sphi 0, %s50
      %s65 = sphi 0, %s51
      %s69 = sphi 0, %s69
      %s71 = sphi 0, %s69
      %s72 = sphi 0, %s71
      %s86 = sphi 0, %s72
      %s90 = sphi 0, %s90
      %s92 = sphi 0, %s90
      %s93 = sphi 0, %s92
      %s107 = sphi 0, %s93
      %s111 = sphi 0, %s111
      %s113 = sphi 0, %s111
      %s114 = sphi 0, %s113
      %s128 = sphi 0, %s114
      %s132 = sphi 0, %s132
      %s134 = sphi 0, %s132
      %s135 = sphi 0, %s134
      %s149 = sphi 0, %s135
      %s153 = sphi 0, %s153
      %s155 = sphi 0, %s153
      %s156 = sphi 0, %s155
      %s170 = sphi 0, %s156
      %s176 = sphi 0, %s178
      %s179 = sphi 0, %s176
      %s180 = sphi 0, %s179
      %s196 = sphi 0, %s180
    $region4: #{forward.1} parent=1 // loop_header_branch
      %17 = sbr.rel (%p15) target = $region8
    $region5: #{forward.1} parent=1 // loop_body
      %s19 = ssub.s32 %s14, 1
      %s20 = ssub.s32 %s14, 2
      %s21 = sadd.s32 %s14, 1
      %s22 = ssub.s32 %s14, %s21
      %p23 = scmp.eq.s32.totalorder %s22, 0
      %s25 = sadd.s32 %s24, 1
      %s26 = scalar_select %p23, %s24, %s25
      %p29 = pneg %p23
      %p30 = scmp.eq.s32.totalorder %s14, 1
      %p31 = por %p29, %p30
      %p32 = scmp.ne.s32.totalorder %s24, %s27
      %p33 = scmp.eq.s32.totalorder %s14, 0
      %p34 = por %p32, %p33
      %p35 = scmp.ne.s32.totalorder %s24, %s27
      %p36 = scmp.eq.s32.totalorder %s19, 1
      %p37 = por %p35, %p36
      %p38 = scmp.ne.s32.totalorder %s27, %s28
      %p39 = scmp.eq.s32.totalorder %s19, 0
      %p40 = por %p38, %p39
      %p41 = scmp.ne.s32.totalorder %s27, %s28
      %p42 = scmp.eq.s32.totalorder %s20, 1
      %p43 = por %p41, %p42
      %p45 = scmp.ne.s32.totalorder %s28, %s44
      %p46 = scmp.eq.s32.totalorder %s20, 0
      %p47 = por %p45, %p46
      %s49 = sadd.s32 %s48, 1
      %p52 = scmp.eq.s32.totalorder %s14, 1
      %p53 = scmp.ne.s32.totalorder %s48, %s50
      %p54 = scmp.eq.s32.totalorder %s14, 0
      %p55 = por %p53, %p54
      %p56 = scmp.ne.s32.totalorder %s48, %s50
      %p57 = scmp.eq.s32.totalorder %s19, 1
      %p58 = por %p56, %p57
      %p59 = scmp.ne.s32.totalorder %s50, %s51
      %p60 = scmp.eq.s32.totalorder %s19, 0
      %p61 = por %p59, %p60
      %p62 = scmp.ne.s32.totalorder %s50, %s51
      %p63 = scmp.eq.s32.totalorder %s20, 1
      %p64 = por %p62, %p63
      %p66 = scmp.ne.s32.totalorder %s51, %s65
      %p67 = scmp.eq.s32.totalorder %s20, 0
      %p68 = por %p66, %p67
      %s70 = sadd.s32 %s69, 1
      %p73 = scmp.eq.s32.totalorder %s14, 1
      %p74 = scmp.ne.s32.totalorder %s69, %s71
      %p75 = scmp.eq.s32.totalorder %s14, 0
      %p76 = por %p74, %p75
      %p77 = scmp.ne.s32.totalorder %s69, %s71
      %p78 = scmp.eq.s32.totalorder %s19, 1
      %p79 = por %p77, %p78
      %p80 = scmp.ne.s32.totalorder %s71, %s72
      %p81 = scmp.eq.s32.totalorder %s19, 0
      %p82 = por %p80, %p81
      %p83 = scmp.ne.s32.totalorder %s71, %s72
      %p84 = scmp.eq.s32.totalorder %s20, 1
      %p85 = por %p83, %p84
      %p87 = scmp.ne.s32.totalorder %s72, %s86
      %p88 = scmp.eq.s32.totalorder %s20, 0
      %p89 = por %p87, %p88
      %s91 = sadd.s32 %s90, 1
      %p94 = scmp.eq.s32.totalorder %s14, 1
      %p95 = scmp.ne.s32.totalorder %s90, %s92
      %p96 = scmp.eq.s32.totalorder %s14, 0
      %p97 = por %p95, %p96
      %p98 = scmp.ne.s32.totalorder %s90, %s92
      %p99 = scmp.eq.s32.totalorder %s19, 1
      %p100 = por %p98, %p99
      %p101 = scmp.ne.s32.totalorder %s92, %s93
      %p102 = scmp.eq.s32.totalorder %s19, 0
      %p103 = por %p101, %p102
      %p104 = scmp.ne.s32.totalorder %s92, %s93
      %p105 = scmp.eq.s32.totalorder %s20, 1
      %p106 = por %p104, %p105
      %p108 = scmp.ne.s32.totalorder %s93, %s107
      %p109 = scmp.eq.s32.totalorder %s20, 0
      %p110 = por %p108, %p109
      %s112 = sadd.s32 %s111, 1
      %p115 = scmp.eq.s32.totalorder %s14, 1
      %p116 = scmp.ne.s32.totalorder %s111, %s113
      %p117 = scmp.eq.s32.totalorder %s14, 0
      %p118 = por %p116, %p117
      %p119 = scmp.ne.s32.totalorder %s111, %s113
      %p120 = scmp.eq.s32.totalorder %s19, 1
      %p121 = por %p119, %p120
      %p122 = scmp.ne.s32.totalorder %s113, %s114
      %p123 = scmp.eq.s32.totalorder %s19, 0
      %p124 = por %p122, %p123
      %p125 = scmp.ne.s32.totalorder %s113, %s114
      %p126 = scmp.eq.s32.totalorder %s20, 1
      %p127 = por %p125, %p126
      %p129 = scmp.ne.s32.totalorder %s114, %s128
      %p130 = scmp.eq.s32.totalorder %s20, 0
      %p131 = por %p129, %p130
      %s133 = sadd.s32 %s132, 1
      %p136 = scmp.eq.s32.totalorder %s14, 1
      %p137 = scmp.ne.s32.totalorder %s132, %s134
      %p138 = scmp.eq.s32.totalorder %s14, 0
      %p139 = por %p137, %p138
      %p140 = scmp.ne.s32.totalorder %s132, %s134
      %p141 = scmp.eq.s32.totalorder %s19, 1
      %p142 = por %p140, %p141
      %p143 = scmp.ne.s32.totalorder %s134, %s135
      %p144 = scmp.eq.s32.totalorder %s19, 0
      %p145 = por %p143, %p144
      %p146 = scmp.ne.s32.totalorder %s134, %s135
      %p147 = scmp.eq.s32.totalorder %s20, 1
      %p148 = por %p146, %p147
      %p150 = scmp.ne.s32.totalorder %s135, %s149
      %p151 = scmp.eq.s32.totalorder %s20, 0
      %p152 = por %p150, %p151
      %s154 = sadd.s32 %s153, 1
      %p157 = scmp.eq.s32.totalorder %s14, 1
      %p158 = scmp.ne.s32.totalorder %s153, %s155
      %p159 = scmp.eq.s32.totalorder %s14, 0
      %p160 = por %p158, %p159
      %p161 = scmp.ne.s32.totalorder %s153, %s155
      %p162 = scmp.eq.s32.totalorder %s19, 1
      %p163 = por %p161, %p162
      %p164 = scmp.ne.s32.totalorder %s155, %s156
      %p165 = scmp.eq.s32.totalorder %s19, 0
      %p166 = por %p164, %p165
      %p167 = scmp.ne.s32.totalorder %s155, %s156
      %p168 = scmp.eq.s32.totalorder %s20, 1
      %p169 = por %p167, %p168
      %p171 = scmp.ne.s32.totalorder %s156, %s170
      %p172 = scmp.eq.s32.totalorder %s20, 0
      %p173 = por %p171, %p172
      %s174 = ssub.s32 %s14, %s21
      %p175 = scmp.eq.s32.totalorder %s174, 0
      %s177 = sadd.s32 %s176, 1
      %s178 = scalar_select %p175, %s176, %s177
      %p181 = pneg %p175
      %p182 = scmp.eq.s32.totalorder %s14, 1
      %p183 = por %p181, %p182
      %p184 = scmp.ne.s32.totalorder %s176, %s179
      %p185 = scmp.eq.s32.totalorder %s14, 0
      %p186 = por %p184, %p185
      %p187 = scmp.ne.s32.totalorder %s176, %s179
      %p188 = scmp.eq.s32.totalorder %s19, 1
      %p189 = por %p187, %p188
      %p190 = scmp.ne.s32.totalorder %s179, %s180
      %p191 = scmp.eq.s32.totalorder %s19, 0
      %p192 = por %p190, %p191
      %p193 = scmp.ne.s32.totalorder %s179, %s180
      %p194 = scmp.eq.s32.totalorder %s20, 1
      %p195 = por %p193, %p194
      %p197 = scmp.ne.s32.totalorder %s180, %s196
      %p198 = scmp.eq.s32.totalorder %s20, 0
      %p199 = por %p197, %p198
      %p200 = scmp.le.s32.totalorder 1, %s14
      %p201 = scmp.lt.s32.totalorder %s14, 3
      %p202 = pnand %p200, %p201
      %p203 = pneg %p202
      // Predicated region
      $region9: #{forward.1} parent=5 // pred_check
        _
      $region10: #{forward.1} parent=5 // pred_check_branch
        %205 = sbr.rel (%p202) target = $region12
      $region11: #{forward.1} parent=5 // pred_region
        %s206 = ssub.s32 %s14, 1
        // Predicated region
        $region13: #{forward.1} parent=11 // pred_check
          %p207 = pneg %p61
        $region14: #{forward.1} parent=11 // pred_check_branch
          %209 = sbr.rel (%p207) target = $region16
        $region15: #{forward.1} parent=11 // pred_region
          %s211 = ssub.s32 256, 256
          %212 = vsyncadd [#allocation3], %s211
          %s213 = sshll.u32 [#allocation2], 4
          %s214 = int_to_ptr.vmem [resolvable:$true] %s213
          %219 = dma.hbm_to_vmem [thread:$0]  %s1, 256, %s214, [#allocation3], 64, 64, 4
        $region16: #{forward.1} parent=11 // pred_fallthru
          _
        // Predicated region
        $region17: #{forward.1} parent=11 // pred_check
          %p220 = pneg %p82
        $region18: #{forward.1} parent=11 // pred_check_branch
          %222 = sbr.rel (%p220) target = $region20
        $region19: #{forward.1} parent=11 // pred_region
          _
        $region20: #{forward.1} parent=11 // pred_fallthru
          _
        // Predicated region
        $region21: #{forward.1} parent=11 // pred_check
          %p223 = pneg %p103
        $region22: #{forward.1} parent=11 // pred_check_branch
          %225 = sbr.rel (%p223) target = $region24
        $region23: #{forward.1} parent=11 // pred_region
          _
        $region24: #{forward.1} parent=11 // pred_fallthru
          _
        // Predicated region
        $region25: #{forward.1} parent=11 // pred_check
          %p226 = pneg %p124
        $region26: #{forward.1} parent=11 // pred_check_branch
          %228 = sbr.rel (%p226) target = $region28
        $region27: #{forward.1} parent=11 // pred_region
          _
        $region28: #{forward.1} parent=11 // pred_fallthru
          _
        // Predicated region
        $region29: #{forward.1} parent=11 // pred_check
          %p229 = pneg %p145
        $region30: #{forward.1} parent=11 // pred_check_branch
          %231 = sbr.rel (%p229) target = $region32
        $region31: #{forward.1} parent=11 // pred_region
          _
        $region32: #{forward.1} parent=11 // pred_fallthru
          _
        // Predicated region
        $region33: #{forward.1} parent=11 // pred_check
          %p232 = pneg %p166
        $region34: #{forward.1} parent=11 // pred_check_branch
          %234 = sbr.rel (%p232) target = $region36
        $region35: #{forward.1} parent=11 // pred_region
          _
        $region36: #{forward.1} parent=11 // pred_fallthru
          _
      $region12: #{forward.1} parent=5 // pred_fallthru
        _
      %p235 = scmp.lt.s32.totalorder %s14, 2
      // Predicated region
      $region37: #{forward.1} parent=5 // pred_check
        %p236 = pneg %p235
      $region38: #{forward.1} parent=5 // pred_check_branch
        %238 = sbr.rel (%p236) target = $region40
      $region39: #{forward.1} parent=5 // pred_region
        // Predicated region
        $region41: #{forward.1} parent=39 // pred_check
          %p239 = pneg %p34
        $region42: #{forward.1} parent=39 // pred_check_branch
          %241 = sbr.rel (%p239) target = $region44
        $region43: #{forward.1} parent=39 // pred_region
          %p242 = scmp.lt.s32.totalorder %s14, 1
          %s243 = scalar_select %p242, %s14, 1
          %s244 = smul.addr %s243, 4
          %s245 = scalar_lea.vmem %s0, %s244
        $region44: #{forward.1} parent=39 // pred_fallthru
          _
      $region40: #{forward.1} parent=5 // pred_fallthru
        _
      %p246 = scmp.le.s32.totalorder 1, %s14
      %p247 = scmp.lt.s32.totalorder %s14, 3
      %p248 = pnand %p246, %p247
      %p249 = pneg %p248
      // Predicated region
      $region45: #{forward.1} parent=5 // pred_check
        _
      $region46: #{forward.1} parent=5 // pred_check_branch
        %251 = sbr.rel (%p248) target = $region48
      $region47: #{forward.1} parent=5 // pred_region
        %s252 = ssub.s32 %s14, 1
        // Predicated region
        $region49: #{forward.1} parent=47 // pred_check
          %p253 = pneg %p61
        $region50: #{forward.1} parent=47 // pred_check_branch
          %255 = sbr.rel (%p253) target = $region52
        $region51: #{forward.1} parent=47 // pred_region
          %256 = dma.done [#allocation3], 256
        $region52: #{forward.1} parent=47 // pred_fallthru
          _
        %p257 = scmp.lt.s32.totalorder %s19, 1
        %s258 = scalar_select %p257, %s19, 1
        %s259 = smul.addr %s258, 4
        %s260 = scalar_lea.vmem %s0, %s259
        %p261 = pneg %p40
        %p262 = pneg %p37
        %p263 = pneg %p61
        %p264 = pneg %p58
        %p265 = pneg %p82
        %p266 = pneg %p79
        %p267 = pneg %p103
        %p268 = pneg %p100
        %p269 = pneg %p124
        %p270 = pneg %p121
        %p271 = pneg %p145
        %p272 = pneg %p142
        %p273 = pneg %p166
        %p274 = pneg %p163
        %p275 = pneg %p192
        %p276 = pneg %p189
        %p277 = scmp.lt.s32.totalorder %s19, 1
        %s278 = scalar_select %p277, %s19, 1
        %s279 = smul.addr %s278, 8
        %s280 = scalar_lea.vmem %s7, %s279
        %p281 = scmp.lt.s32.totalorder %s19, 1
        %s282 = scalar_select %p281, %s19, 1
        %s283 = smul.addr %s282, 4
        %s284 = scalar_lea.vmem %s0, %s283
        %p285 = scmp.lt.s32.totalorder %s19, 1
        %s286 = scalar_select %p285, %s19, 1
        %s287 = smul.addr %s286, 8
        %s288 = scalar_lea.vmem %s7, %s287
        %v290 = vld [vmem:[%s284] sm:$0xf]
        %v291 = vld [vmem:[#allocation2] sm:$0xf]
        %v292 = vld [vmem:[#allocation2 + $0x4] sm:$0xf]
        %v293 = vld [vmem:[#allocation2 + $0x8] sm:$0xf]
        %v294 = vld [vmem:[#allocation2 + $0xc] sm:$0xf]
        %v295 = vld [vmem:[%s2] sm:$0x1]
        %v297 = vlaneseq
        %v298 = vshrl.u32 %v297, 7
        %v299 = vsub.s32 0, %v298
        %v300 = vrot.slane %v295, %v299
        %v306 = vunpack.c.l.b16 %v291
        %v307 = vunpack.c.l.b16 %v292
        %v308 = vunpack.c.l.b16 %v293
        %v309 = vunpack.c.l.b16 %v294
        %v310 = vpack.c.b16 %v307, %v306
        %v311 = vpack.c.b16 %v309, %v308
        %vm314 = vcmask 261120
        %v316 = vsel %vm314, %v290, 0
        %318 = vmatprep.subr.bf16.mxu0 0
        %319 = vmatpush1.bf16.msra.mxu0 0
        %320 = vmatprep.subr.bf16.mxu0 0
        %321 = vmatpush1.bf16.msra.mxu0 0
        %322 = vmatprep.subr.bf16.mxu0 0
        %323 = vmatpush1.bf16.msra.mxu0 0
        %324 = vmatprep.subr.bf16.mxu0 0
        %325 = vmatpush1.bf16.msra.mxu0 0
        %326 = vmatprep.subr.bf16.mxu0 0
        %327 = vmatpush1.bf16.msra.mxu0 0
        %328 = vmatprep.subr.bf16.mxu0 0
        %329 = vmatpush1.bf16.msra.mxu0 0
        %330 = vmatprep.subr.bf16.mxu0 0
        %331 = vmatpush1.bf16.msra.mxu0 %v311
        %332 = vmatprep.subr.bf16.mxu0 0
        %333 = vmatpush1.bf16.msra.mxu0 %v310
        %334 = vmatprep.subr.bf16.mxu0 0
        %335 = vmatpush2.bf16.msra.mxu0 0
        %336 = vmatprep.subr.bf16.mxu0 0
        %337 = vmatpush2.bf16.msra.mxu0 0
        %338 = vmatprep.subr.bf16.mxu0 0
        %339 = vmatpush2.bf16.msra.mxu0 0
        %340 = vmatprep.subr.bf16.mxu0 0
        %341 = vmatpush2.bf16.msra.mxu0 0
        %342 = vmatprep.subr.bf16.mxu0 0
        %343 = vmatpush2.bf16.msra.mxu0 0
        %344 = vmatprep.subr.bf16.mxu0 0
        %345 = vmatpush2.bf16.msra.mxu0 0
        %346 = vmatprep.subr.bf16.mxu0 0
        %347 = vmatpush2.bf16.msra.mxu0 0
        %348 = vmatprep.subr.bf16.mxu0 0
        %349 = vmatpush2.bf16.msra.mxu0 0
        %350 = vmatprep.mubr.bf16.mxu0 0
        %351 = vmatmul.mubr.bf16.gmra.mxu0 %v316
        %v352 = vpop.f32.mrf.mxu0
        %v353 = vadd.f32 %v300, %v352
        %v354 = vpop.f32.mrf.mxu0
        %v355 = vpop.f32.mrf.mxu0
        %v356 = vpop.f32.mrf.mxu0
        %357 = vdwg.mxu0
        %v358 = vmax.f32 %v353, 0.0
        %v359 = vpack.c.bf16 %v358, %v358
        %v360 = vld [vmem:[%s3] sm:$0xf]
        %v361 = vld [vmem:[%s3 + $0x4] sm:$0xf]
        %v362 = vld [vmem:[%s3 + $0x8] sm:$0xf]
        %v363 = vld [vmem:[%s3 + $0xc] sm:$0xf]
        %v364 = vld [vmem:[%s4] sm:$0x1]
        %v366 = vlaneseq
        %v367 = vshrl.u32 %v366, 7
        %v368 = vsub.s32 0, %v367
        %v369 = vrot.slane %v364, %v368
        %v375 = vunpack.c.l.b16 %v360
        %v376 = vunpack.c.l.b16 %v361
        %v377 = vunpack.c.l.b16 %v362
        %v378 = vunpack.c.l.b16 %v363
        %v379 = vpack.c.b16 %v376, %v375
        %v380 = vpack.c.b16 %v378, %v377
        %v384 = vsel %vm314, %v359, 0
        %386 = vmatprep.subr.bf16.mxu0 0
        %387 = vmatpush1.bf16.msra.mxu0 0
        %388 = vmatprep.subr.bf16.mxu0 0
        %389 = vmatpush1.bf16.msra.mxu0 0
        %390 = vmatprep.subr.bf16.mxu0 0
        %391 = vmatpush1.bf16.msra.mxu0 0
        %392 = vmatprep.subr.bf16.mxu0 0
        %393 = vmatpush1.bf16.msra.mxu0 0
        %394 = vmatprep.subr.bf16.mxu0 0
        %395 = vmatpush1.bf16.msra.mxu0 0
        %396 = vmatprep.subr.bf16.mxu0 0
        %397 = vmatpush1.bf16.msra.mxu0 0
        %398 = vmatprep.subr.bf16.mxu0 0
        %399 = vmatpush1.bf16.msra.mxu0 %v380
        %400 = vmatprep.subr.bf16.mxu0 0
        %401 = vmatpush1.bf16.msra.mxu0 %v379
        %402 = vmatprep.subr.bf16.mxu0 0
        %403 = vmatpush2.bf16.msra.mxu0 0
        %404 = vmatprep.subr.bf16.mxu0 0
        %405 = vmatpush2.bf16.msra.mxu0 0
        %406 = vmatprep.subr.bf16.mxu0 0
        %407 = vmatpush2.bf16.msra.mxu0 0
        %408 = vmatprep.subr.bf16.mxu0 0
        %409 = vmatpush2.bf16.msra.mxu0 0
        %410 = vmatprep.subr.bf16.mxu0 0
        %411 = vmatpush2.bf16.msra.mxu0 0
        %412 = vmatprep.subr.bf16.mxu0 0
        %413 = vmatpush2.bf16.msra.mxu0 0
        %414 = vmatprep.subr.bf16.mxu0 0
        %415 = vmatpush2.bf16.msra.mxu0 0
        %416 = vmatprep.subr.bf16.mxu0 0
        %417 = vmatpush2.bf16.msra.mxu0 0
        %418 = vmatprep.mubr.bf16.mxu0 0
        %419 = vmatmul.mubr.bf16.gmra.mxu0 %v384
        %v420 = vpop.f32.mrf.mxu0
        %v421 = vadd.f32 %v369, %v420
        %v422 = vpop.f32.mrf.mxu0
        %v423 = vpop.f32.mrf.mxu0
        %v424 = vpop.f32.mrf.mxu0
        %425 = vdwg.mxu0
        %v426 = vmax.f32 %v421, 0.0
        %v427 = vpack.c.bf16 %v426, %v426
        %v428 = vld [vmem:[%s5] sm:$0xf]
        %v429 = vld [vmem:[%s5 + $0x4] sm:$0xf]
        %v430 = vld [vmem:[%s5 + $0x8] sm:$0xf]
        %v431 = vld [vmem:[%s5 + $0xc] sm:$0xf]
        %v432 = vld [vmem:[%s6] sm:$0x1]
        %v434 = vlaneseq
        %v435 = vshrl.u32 %v434, 7
        %v436 = vsub.s32 0, %v435
        %v437 = vrot.slane %v432, %v436
        %v443 = vunpack.c.l.b16 %v428
        %v444 = vunpack.c.l.b16 %v429
        %v445 = vunpack.c.l.b16 %v430
        %v446 = vunpack.c.l.b16 %v431
        %v447 = vpack.c.b16 %v444, %v443
        %v448 = vpack.c.b16 %v446, %v445
        %v452 = vsel %vm314, %v427, 0
        %454 = vmatprep.subr.bf16.mxu0 0
        %455 = vmatpush1.bf16.msra.mxu0 0
        %456 = vmatprep.subr.bf16.mxu0 0
        %457 = vmatpush1.bf16.msra.mxu0 0
        %458 = vmatprep.subr.bf16.mxu0 0
        %459 = vmatpush1.bf16.msra.mxu0 0
        %460 = vmatprep.subr.bf16.mxu0 0
        %461 = vmatpush1.bf16.msra.mxu0 0
        %462 = vmatprep.subr.bf16.mxu0 0
        %463 = vmatpush1.bf16.msra.mxu0 0
        %464 = vmatprep.subr.bf16.mxu0 0
        %465 = vmatpush1.bf16.msra.mxu0 0
        %466 = vmatprep.subr.bf16.mxu0 0
        %467 = vmatpush1.bf16.msra.mxu0 %v448
        %468 = vmatprep.subr.bf16.mxu0 0
        %469 = vmatpush1.bf16.msra.mxu0 %v447
        %470 = vmatprep.subr.bf16.mxu0 0
        %471 = vmatpush2.bf16.msra.mxu0 0
        %472 = vmatprep.subr.bf16.mxu0 0
        %473 = vmatpush2.bf16.msra.mxu0 0
        %474 = vmatprep.subr.bf16.mxu0 0
        %475 = vmatpush2.bf16.msra.mxu0 0
        %476 = vmatprep.subr.bf16.mxu0 0
        %477 = vmatpush2.bf16.msra.mxu0 0
        %478 = vmatprep.subr.bf16.mxu0 0
        %479 = vmatpush2.bf16.msra.mxu0 0
        %480 = vmatprep.subr.bf16.mxu0 0
        %481 = vmatpush2.bf16.msra.mxu0 0
        %482 = vmatprep.subr.bf16.mxu0 0
        %483 = vmatpush2.bf16.msra.mxu0 0
        %484 = vmatprep.subr.bf16.mxu0 0
        %485 = vmatpush2.bf16.msra.mxu0 0
        %486 = vmatprep.mubr.bf16.mxu0 0
        %487 = vmatmul.mubr.bf16.gmra.mxu0 %v452
        %v488 = vpop.f32.mrf.mxu0
        %v489 = vadd.f32 %v437, %v488
        %v490 = vpop.f32.mrf.mxu0
        %v491 = vpop.f32.mrf.mxu0
        %v492 = vpop.f32.mrf.mxu0
        %493 = vdwg.mxu0
        %v494 = vtanh.pop %v489
        %495 = vst [vmem:[%s288] sm:$0xff] %v494
        %p496 = scmp.lt.s32.totalorder %s19, 1
        %s497 = scalar_select %p496, %s19, 1
        %s498 = smul.addr %s497, 8
        %s499 = scalar_lea.vmem %s7, %s498
        // Predicated region
        $region53: #{forward.1} parent=47 // pred_check
          %p500 = pneg %p189
        $region54: #{forward.1} parent=47 // pred_check_branch
          %502 = sbr.rel (%p500) target = $region56
        $region55: #{forward.1} parent=47 // pred_region
          _
        $region56: #{forward.1} parent=47 // pred_fallthru
          _
      $region48: #{forward.1} parent=5 // pred_fallthru
        _
      %p503 = scmp.le.s32.totalorder 2, %s14
      // Predicated region
      $region57: #{forward.1} parent=5 // pred_check
        %p504 = pneg %p503
      $region58: #{forward.1} parent=5 // pred_check_branch
        %506 = sbr.rel (%p504) target = $region60
      $region59: #{forward.1} parent=5 // pred_region
        %s507 = ssub.s32 %s14, 2
        // Predicated region
        $region61: #{forward.1} parent=59 // pred_check
          %p508 = pneg %p195
        $region62: #{forward.1} parent=59 // pred_check_branch
          %510 = sbr.rel (%p508) target = $region64
        $region63: #{forward.1} parent=59 // pred_region
          %p511 = scmp.lt.s32.totalorder %s20, 1
          %s512 = scalar_select %p511, %s20, 1
          %s513 = smul.addr %s512, 8
          %s514 = scalar_lea.vmem %s7, %s513
        $region64: #{forward.1} parent=59 // pred_fallthru
          _
      $region60: #{forward.1} parent=5 // pred_fallthru
        _
    $region6: #{forward.1} parent=1 // loop_footer
      %s18 = sadd.s32 1, %s14
    $region7: #{forward.1} parent=1 // loop_footer_branch
      %13 = sbr.rel target = $region3
    $region8: #{forward.1} parent=1 // loop_exit
      _
    %515 = vsyncpa [#allocation3], 1
    %s516 = scalar_lea.sflag [#allocation3], 1
    %517 = vsyncpa %s516, 1

</llo_original>
